<compile_context>
chip_gen: v5e
topology: v5e:2x2
jax: 0.10.0
libtpu: 0.0.40
codegen_flags: <defaults>
</compile_context>

<pallas_src>
import jax
import jax.numpy as jnp
from jax.experimental import pallas as pl
from jax.experimental.pallas import tpu as pltpu


def _round_up(n, m):
    return ((n + m - 1) // m) * m


def _vmem_cap_bytes():
    """Physical VMEM minus headroom for compiler scratch / semaphores."""
    phys = None
    try:
        get_info = getattr(pltpu, "get_tpu_info", None)
        if get_info is not None:
            phys = int(get_info().vmem_capacity_bytes)
    except Exception:
        phys = None
    if not phys or phys <= 0:
        phys = 64 << 20                      # conservative: v7x per-TC VMEM
    return max(phys - (16 << 20), 16 << 20)  # leave ~16 MiB headroom


def _make_kernel(col_tiled, bf16_mul):
    def kernel(x_ref, w_ref, b_ref, o_ref):
        # x_ref : (tm, Hin)   row tile, native dtype (feeds the MXU directly)
        # w_ref : (Hin, tn)   weight in (in, out) layout (pre-transposed)
        # b_ref : (1, tn)     bias, pre-cast to f32 in the wrapper
        # o_ref : (tm, tn)
        x = x_ref[...]
        logits = jnp.dot(x, w_ref[...], preferred_element_type=jnp.float32)
        logits = logits + b_ref[...]
        # sigmoid: exp lands on the EUP; exact reciprocal keeps numerics tight.
        gate = pl.reciprocal(1.0 + jnp.exp(-logits), approx=False)
        if col_tiled:
            tn = o_ref.shape[-1]
            start = pl.multiple_of(pl.program_id(1) * tn, 128)
            x_g = x_ref[:, pl.ds(start, tn)]
        else:
            x_g = x
        if bf16_mul:
            o_ref[...] = gate.astype(jnp.bfloat16) * x_g
        else:
            o_ref[...] = (gate * x_g.astype(jnp.float32)).astype(o_ref.dtype)

    return kernel


def gated_attention(x, w, b, *, tm=512):
    """x: (..., H); w: (H, H) in PyTorch (out, in) layout; b: (H,)."""
    orig_shape = x.shape
    H = orig_shape[-1]
    x2d = x.reshape(-1, H)
    M = x2d.shape[0]
    xi = x2d.dtype.itemsize
    wi = w.dtype.itemsize

    # ---- lane layout: fold small H into a 128-lane slab instead of zero-pad --
    if H < 128 and 128 % H == 0:
        F = 128 // H
        Hin = F * H                                        # == 128, lane dense
        w_eff = jnp.kron(jnp.eye(F, dtype=w.dtype), w.T)   # block-diag W^T, (in,out)
        b_eff = jnp.tile(b, F)
    else:
        F = 1
        Hin = _round_up(H, 128)
        w_eff = w.T                      # one-time transpose outside the grid loop
        b_eff = b
        if Hin != H:
            w_eff = jnp.pad(w_eff, ((0, Hin - H), (0, Hin - H)))
            b_eff = jnp.pad(b_eff, (0, Hin - H))
    Hout = Hin
    b2d = b_eff.reshape(1, Hout).astype(jnp.float32)

    cap = _vmem_cap_bytes()

    # ---- column tile: whole Hout if resident W fits, else a divisor of Hout --
    n128 = Hout // 128
    tn = Hout
    if 2 * Hin * Hout * wi > cap // 2:
        d_best = 1
        for d in range(n128, 0, -1):
            if n128 % d == 0 and 2 * Hin * (128 * d) * wi <= cap // 2:
                d_best = d
                break
        tn = 128 * d_best
        # TODO(synk): for extreme Hin where even a (Hin, 128) W block overflows
        # VMEM a K-reduction grid axis would be needed; not required here.
    n_col = Hout // tn

    # ---- row tile --------------------------------------------------------------
    Mf = -(-M // F)                       # folded slab rows (ceil)
    tm_eff = min(_round_up(tm, 8), _round_up(Mf, 8))

    def _tiles_needed(tm_c):
        return (2 * tm_c * Hin * xi + 2 * tm_c * tn * xi
                + 2 * Hin * tn * wi + 2 * tn * 4)

    while tm_eff > 8 and _tiles_needed(tm_eff) + (4 << 20) > cap:
        tm_eff = max(8, _round_up(tm_eff // 2, 8))
    Mp = _round_up(Mf, tm_eff)
    # v7x has 2 TensorCores: make sure the parallel row axis has >= 2 steps.
    while tm_eff > 8 and Mp // tm_eff < 2:
        tm_eff = max(8, _round_up(tm_eff // 2, 8))
        Mp = _round_up(Mf, tm_eff)

    # ---- build the (Mp, Hin) slab: one pad (only if needed) + free reshape ----
    pad_rows = Mp * F - M
    pad_cols = (Hin - H) if F == 1 else 0
    if pad_rows or pad_cols:
        x2d = jnp.pad(x2d, ((0, pad_rows), (0, pad_cols)))
    x_slab = x2d.reshape(Mp, Hin)

    grid = (Mp // tm_eff, n_col)
    bf16_mul = (x_slab.dtype == jnp.bfloat16)
    kernel = _make_kernel(col_tiled=(n_col > 1), bf16_mul=bf16_mul)

    needed = _tiles_needed(tm_eff)
    vmem_limit = int(min(max(needed + (4 << 20), 16 << 20), cap))

    def _run(single_buffer_resident):
        def res_spec(shape, imap):
            if single_buffer_resident:
                return pl.BlockSpec(shape, imap, pipeline_mode=pl.Buffered(1))
            return pl.BlockSpec(shape, imap)

        return pl.pallas_call(
            kernel,
            out_shape=jax.ShapeDtypeStruct((Mp, Hout), x.dtype),
            grid_spec=pltpu.PrefetchScalarGridSpec(
                num_scalar_prefetch=0,
                grid=grid,
                in_specs=[
                    pl.BlockSpec((tm_eff, Hin), lambda i, j: (i, 0)),  # x row tile
                    res_spec((Hin, tn), lambda i, j: (0, j)),          # W (in,out)
                    res_spec((1, tn), lambda i, j: (0, j)),            # bias
                ],
                out_specs=pl.BlockSpec((tm_eff, tn), lambda i, j: (i, j)),
            ),
            compiler_params=pltpu.CompilerParams(
                dimension_semantics=("parallel", "arbitrary"),
                vmem_limit_bytes=vmem_limit,
            ),
        )(x_slab, w_eff, b2d)

    want_single = (n_col == 1) and hasattr(pl, "Buffered")
    if want_single:
        try:
            out = _run(True)
        except Exception:
            out = _run(False)        # older jax: no pipeline_mode / Buffered(1)
    else:
        out = _run(False)

    # ---- unfold / trim only when actually needed -------------------------------
    if F > 1:
        out_l = out.reshape(Mp * F, H)
        if Mp * F != M:
            out_l = out_l[:M]
    else:
        out_l = out if (Mp == M and Hin == H) else out[:M, :H]
    return out_l.reshape(orig_shape)


def _reference(x, w, b):
    # Pure-JAX reference of the PyTorch forward (HIGHEST so f32 matches the MXU).
    logits = jnp.einsum("...i,oi->...o", x, w, precision=jax.lax.Precision.HIGHEST)
    return jax.nn.sigmoid(logits + b) * x


if __name__ == "__main__":
    key = jax.random.PRNGKey(0)
    k_x, k_w, k_b, k_x2 = jax.random.split(key, 4)

    B, S, H = 2, 8, 32          # hidden_dim = 32; x: (batch=2, seq=8, hidden=32)
    x = jax.random.normal(k_x, (B, S, H), dtype=jnp.float32)

    # Deterministic params (mimics nn.Linear's uniform(-1/sqrt(H), 1/sqrt(H)))
    bound = 1.0 / jnp.sqrt(H)
    w = jax.random.uniform(k_w, (H, H), minval=-bound, maxval=bound, dtype=jnp.float32)
    b = jax.random.uniform(k_b, (H,), minval=-bound, maxval=bound, dtype=jnp.float32)

    out = jax.block_until_ready(gated_attention(x, w, b))
    ref = _reference(x, w, b)
    assert out.shape == x.shape and out.dtype == x.dtype
    assert jnp.allclose(out, ref, atol=2e-4, rtol=2e-4), "mismatch vs reference"

    # Row count not a multiple of the fold factor / sublane tile: padding path.
    x2 = jax.random.normal(k_x2, (3, 5, H), dtype=jnp.float32)
    out2 = jax.block_until_ready(gated_attention(x2, w, b))
    assert jnp.allclose(out2, _reference(x2, w, b), atol=2e-4, rtol=2e-4), \
        "mismatch vs reference (padded rows)"

    # bf16 path (gate*x multiply done in bf16): loose-tolerance smoke check.
    xb = x.astype(jnp.bfloat16)
    out3 = jax.block_until_ready(
        gated_attention(xb, w.astype(jnp.bfloat16), b.astype(jnp.bfloat16)))
    assert out3.dtype == jnp.bfloat16
    assert jnp.allclose(out3.astype(jnp.float32), ref, atol=6e-2, rtol=6e-2), \
        "mismatch vs reference (bf16)"

    # TODO(synk): the PyTorch module also caches `self.weights = sigmoid(...)` as a
    # side-effect; that tensor is not part of the returned value, so it is not
    # materialized here.
    print("KERNEL_OK")
</pallas_src>

<mosaic_0001>
module attributes {stable_mosaic.version = 11 : i64} {
  func.func @kernel(%arg0: i32, %arg1: i32, %arg2: memref<8x128xf32, #tpu.memory_space<vmem>>, %arg3: memref<128x128xf32, #tpu.memory_space<vmem>>, %arg4: memref<1x128xf32, #tpu.memory_space<vmem>>, %arg5: memref<8x128xf32, #tpu.memory_space<vmem>>) attributes {dimension_semantics = [#tpu.dimension_semantics<parallel>, #tpu.dimension_semantics<arbitrary>], iteration_bounds = array<i64: 1, 1>, scalar_prefetch = 0 : i64, scratch_operands = 0 : i64, tpu.core_type = #tpu.core_type<tc>, window_params = [{transform_indices = @transform_0, window_bounds = array<i64: 8, 128>}, {pipeline_mode = #tpu.pipeline_mode<synchronous>, transform_indices = @transform_1, window_bounds = array<i64: 128, 128>}, {pipeline_mode = #tpu.pipeline_mode<synchronous>, transform_indices = @transform_2, window_bounds = array<i64: 1, 128>}, {transform_indices = @transform_3, window_bounds = array<i64: 8, 128>}]} {
    %c0 = arith.constant 0 : index
    %c0_0 = arith.constant 0 : index
    %0 = vector.load %arg2[%c0, %c0_0] : memref<8x128xf32, #tpu.memory_space<vmem>>, vector<8x128xf32>
    %c0_1 = arith.constant 0 : index
    %c0_2 = arith.constant 0 : index
    %1 = vector.load %arg3[%c0_1, %c0_2] : memref<128x128xf32, #tpu.memory_space<vmem>>, vector<128x128xf32>
    %cst = arith.constant dense<0.000000e+00> : vector<8x128xf32>
    %2 = tpu.matmul %0, %1, %cst {dimension_numbers = #tpu.dot_dimension_numbers<[1], [0], [0], [1], [0, 0, 1, 1], [], []>} : vector<8x128xf32>, vector<128x128xf32>, vector<8x128xf32> -> vector<8x128xf32>
    %c0_3 = arith.constant 0 : index
    %c0_4 = arith.constant 0 : index
    %3 = vector.load %arg4[%c0_3, %c0_4] : memref<1x128xf32, #tpu.memory_space<vmem>>, vector<1x128xf32>
    %4 = vector.broadcast %3 : vector<1x128xf32> to vector<8x128xf32>
    %5 = arith.addf %2, %4 : vector<8x128xf32>
    %cst_5 = arith.constant 0.000000e+00 : f32
    %6 = vector.broadcast %cst_5 : f32 to vector<8x128xf32>
    %7 = arith.subf %6, %5 : vector<8x128xf32>
    %8 = math.exp %7 : vector<8x128xf32>
    %cst_6 = arith.constant 1.000000e+00 : f32
    %9 = vector.broadcast %cst_6 : f32 to vector<8x128xf32>
    %10 = arith.addf %9, %8 : vector<8x128xf32>
    %11 = tpu.reciprocal %10 : vector<8x128xf32> -> vector<8x128xf32>
    %12 = arith.mulf %11, %0 : vector<8x128xf32>
    %c0_7 = arith.constant 0 : index
    %c0_8 = arith.constant 0 : index
    %13 = vector.load %arg5[%c0_7, %c0_8] : memref<8x128xf32, #tpu.memory_space<vmem>>, vector<8x128xf32>
    tpu.vector_store %arg5[%c0_7, %c0_8], %12 {strides = array<i32>} : memref<8x128xf32, #tpu.memory_space<vmem>>, vector<8x128xf32>,
    return
  }
  func.func @transform_0(%arg0: i32, %arg1: i32) -> (i32, i32) {
    %c0_i32 = arith.constant 0 : i32
    %c0_i32_0 = arith.constant 0 : i32
    return %arg0, %c0_i32 : i32, i32
  }
  func.func @transform_1(%arg0: i32, %arg1: i32) -> (i32, i32) {
    %c0_i32 = arith.constant 0 : i32
    %c0_i32_0 = arith.constant 0 : i32
    return %c0_i32, %arg1 : i32, i32
  }
  func.func @transform_2(%arg0: i32, %arg1: i32) -> (i32, i32) {
    %c0_i32 = arith.constant 0 : i32
    %c0_i32_0 = arith.constant 0 : i32
    return %c0_i32, %arg1 : i32, i32
  }
  func.func @transform_3(%arg0: i32, %arg1: i32) -> (i32, i32) {
    %c0_i32 = arith.constant 0 : i32
    return %arg0, %arg1 : i32, i32
  }
}

module attributes {stable_mosaic.version = 11 : i64} {
  func.func @kernel(%arg0: i32, %arg1: i32, %arg2: memref<8x128xf32, #tpu.memory_space<vmem>>, %arg3: memref<128x128xf32, #tpu.memory_space<vmem>>, %arg4: memref<1x128xf32, #tpu.memory_space<vmem>>, %arg5: memref<8x128xf32, #tpu.memory_space<vmem>>) attributes {dimension_semantics = [#tpu.dimension_semantics<parallel>, #tpu.dimension_semantics<arbitrary>], iteration_bounds = array<i64: 1, 1>, scalar_prefetch = 0 : i64, scratch_operands = 0 : i64, tpu.core_type = #tpu.core_type<tc>, window_params = [{transform_indices = @transform_0, window_bounds = array<i64: 8, 128>}, {transform_indices = @transform_1, window_bounds = array<i64: 128, 128>}, {transform_indices = @transform_2, window_bounds = array<i64: 1, 128>}, {transform_indices = @transform_3, window_bounds = array<i64: 8, 128>}]} {
    %c0 = arith.constant 0 : index
    %c0_0 = arith.constant 0 : index
    %0 = vector.load %arg2[%c0, %c0_0] : memref<8x128xf32, #tpu.memory_space<vmem>>, vector<8x128xf32>
    %c0_1 = arith.constant 0 : index
    %c0_2 = arith.constant 0 : index
    %1 = vector.load %arg3[%c0_1, %c0_2] : memref<128x128xf32, #tpu.memory_space<vmem>>, vector<128x128xf32>
    %cst = arith.constant dense<0.000000e+00> : vector<8x128xf32>
    %2 = tpu.matmul %0, %1, %cst {dimension_numbers = #tpu.dot_dimension_numbers<[1], [0], [0], [1], [0, 0, 1, 1], [], []>} : vector<8x128xf32>, vector<128x128xf32>, vector<8x128xf32> -> vector<8x128xf32>
    %c0_3 = arith.constant 0 : index
    %c0_4 = arith.constant 0 : index
    %3 = vector.load %arg4[%c0_3, %c0_4] : memref<1x128xf32, #tpu.memory_space<vmem>>, vector<1x128xf32>
    %4 = vector.broadcast %3 : vector<1x128xf32> to vector<8x128xf32>
    %5 = arith.addf %2, %4 : vector<8x128xf32>
    %cst_5 = arith.constant 0.000000e+00 : f32
    %6 = vector.broadcast %cst_5 : f32 to vector<8x128xf32>
    %7 = arith.subf %6, %5 : vector<8x128xf32>
    %8 = math.exp %7 : vector<8x128xf32>
    %cst_6 = arith.constant 1.000000e+00 : f32
    %9 = vector.broadcast %cst_6 : f32 to vector<8x128xf32>
    %10 = arith.addf %9, %8 : vector<8x128xf32>
    %11 = tpu.reciprocal %10 : vector<8x128xf32> -> vector<8x128xf32>
    %12 = arith.mulf %11, %0 : vector<8x128xf32>
    %c0_7 = arith.constant 0 : index
    %c0_8 = arith.constant 0 : index
    %13 = vector.load %arg5[%c0_7, %c0_8] : memref<8x128xf32, #tpu.memory_space<vmem>>, vector<8x128xf32>
    tpu.vector_store %arg5[%c0_7, %c0_8], %12 {strides = array<i32>} : memref<8x128xf32, #tpu.memory_space<vmem>>, vector<8x128xf32>,
    return
  }
  func.func @transform_0(%arg0: i32, %arg1: i32) -> (i32, i32) {
    %c0_i32 = arith.constant 0 : i32
    %c0_i32_0 = arith.constant 0 : i32
    return %arg0, %c0_i32 : i32, i32
  }
  func.func @transform_1(%arg0: i32, %arg1: i32) -> (i32, i32) {
    %c0_i32 = arith.constant 0 : i32
    %c0_i32_0 = arith.constant 0 : i32
    return %c0_i32, %arg1 : i32, i32
  }
  func.func @transform_2(%arg0: i32, %arg1: i32) -> (i32, i32) {
    %c0_i32 = arith.constant 0 : i32
    %c0_i32_0 = arith.constant 0 : i32
    return %c0_i32, %arg1 : i32, i32
  }
  func.func @transform_3(%arg0: i32, %arg1: i32) -> (i32, i32) {
    %c0_i32 = arith.constant 0 : i32
    return %arg0, %arg1 : i32, i32
  }
}

</mosaic_0001>

<llo_original>
// kernel: tpu_custom_call.1
$region0: #{tpu_custom_call.1}
  #allocation0 [shape = 'u32[]', space=smem, size = 0x4, offset = 0x4, fixed_abs, tag = 'smem constant byte address 0x4 - core index']
  #allocation1 [shape = 'u32[72,128]{1,0:T(1,128)}', space=vmem, size = 0x9000, scoped, tag = 'internal scratch']
  %s0 = inlined_call_operand.hbm [shape: f32[8,128], index: 0, kind: input, shape index: {}]
  %s1 = inlined_call_operand.hbm [shape: f32[128,128], index: 1, kind: input, shape index: {}]
  %s2 = inlined_call_operand.vmem [shape: f32[1,128], index: 2, kind: input, shape index: {}]
  %s3 = inlined_call_operand.hbm [shape: f32[8,128], index: 3, kind: output, shape index: {}]
  %s4 = sld [smem:[#allocation0]]
  $region30: #{tpu_custom_call.1} parent=0
    _
  %s6 = ssub.s32 1, %s4
  %s7 = scalar_select 0, %s6, %s4
  $region1: #{tpu_custom_call.1} parent=0
    #allocation2 [shape = 'u8[4096]{0}', space=vmem, size = 0x1000, scoped, tag = 'input window, operand 0, single buffered']
    #allocation3 [shape = 's32[1]{0}', space=sflag, size = 0x4, scoped, tag = 'scoped memory for tpu_custom_call.1']
    #allocation4 [shape = 's32[1]{0}', space=sflag, size = 0x4, scoped, tag = 'scoped memory for tpu_custom_call.1']
    #allocation5 [shape = 'u8[65536]{0}', space=vmem, size = 0x10000, scoped, tag = 'input window, operand 1, single buffered']
    #allocation6 [shape = 's32[1]{0}', space=sflag, size = 0x4, scoped, tag = 'scoped memory for tpu_custom_call.1']
    #allocation7 [shape = 'u8[4096]{0}', space=vmem, size = 0x1000, scoped, tag = 'output window, operand 0, single buffered']
    %8 = vsyncpa [#allocation3], 0
    %9 = vsyncpa [#allocation6], 0
    %10 = vsyncpa [#allocation4], 0
    // Predicated region
    $region2: #{tpu_custom_call.1} parent=1 // pred_check
      _
    $region3: #{tpu_custom_call.1} parent=1 // pred_check_branch
      %12 = sbr.rel (0) target = $region5
    $region4: #{tpu_custom_call.1} parent=1 // pred_region
      %14 = vsyncadd [#allocation3], 0
      %s16 = sshll.u32 %s0, 4
      %s17 = int_to_ptr.hbm [resolvable:$true] %s16
      %s18 = sshll.u32 [#allocation2], 4
      %s19 = int_to_ptr.vmem [resolvable:$true] %s18
      %21 = dma.hbm_to_vmem [thread:$0]  %s17, 128, %s19, [#allocation3]
    $region5: #{tpu_custom_call.1} parent=1 // pred_fallthru
      _
    // Predicated region
    $region6: #{tpu_custom_call.1} parent=1 // pred_check
      _
    $region7: #{tpu_custom_call.1} parent=1 // pred_check_branch
      %23 = sbr.rel (0) target = $region9
    $region8: #{tpu_custom_call.1} parent=1 // pred_region
      %25 = vsyncadd [#allocation6], 0
      %s26 = sshll.u32 %s1, 4
      %s27 = int_to_ptr.hbm [resolvable:$true] %s26
      %s28 = sshll.u32 [#allocation5], 4
      %s29 = int_to_ptr.vmem [resolvable:$true] %s28
      %34 = dma.hbm_to_vmem [thread:$0]  %s27, 2048, %s29, [#allocation6], 128, 128, 8
    $region9: #{tpu_custom_call.1} parent=1 // pred_fallthru
      _
    // Predicated region
    $region10: #{tpu_custom_call.1} parent=1 // pred_check
      _
    $region11: #{tpu_custom_call.1} parent=1 // pred_check_branch
      %36 = sbr.rel (0) target = $region13
    $region12: #{tpu_custom_call.1} parent=1 // pred_region
      _
    $region13: #{tpu_custom_call.1} parent=1 // pred_fallthru
      _
    // Predicated region
    $region14: #{tpu_custom_call.1} parent=1 // pred_check
      _
    $region15: #{tpu_custom_call.1} parent=1 // pred_check_branch
      %38 = sbr.rel (0) target = $region17
    $region16: #{tpu_custom_call.1} parent=1 // pred_region
      %40 = dma.done [#allocation3], 128
    $region17: #{tpu_custom_call.1} parent=1 // pred_fallthru
      _
    // Predicated region
    $region18: #{tpu_custom_call.1} parent=1 // pred_check
      _
    $region19: #{tpu_custom_call.1} parent=1 // pred_check_branch
      %42 = sbr.rel (0) target = $region21
    $region20: #{tpu_custom_call.1} parent=1 // pred_region
      %44 = dma.done [#allocation6], 2048
    $region21: #{tpu_custom_call.1} parent=1 // pred_fallthru
      _
    %v45 = vld [vmem:[#allocation2] sm:$0xff]
    %v46 = vld [vmem:[#allocation5] sm:$0xff]
    %v47 = vld [vmem:[#allocation5 + $0x8] sm:$0xff]
    %v48 = vld [vmem:[#allocation5 + $0x10] sm:$0xff]
    %v49 = vld [vmem:[#allocation5 + $0x18] sm:$0xff]
    %v50 = vld [vmem:[#allocation5 + $0x20] sm:$0xff]
    %v51 = vld [vmem:[#allocation5 + $0x28] sm:$0xff]
    %v52 = vld [vmem:[#allocation5 + $0x30] sm:$0xff]
    %v53 = vld [vmem:[#allocation5 + $0x38] sm:$0xff]
    %v54 = vld [vmem:[#allocation5 + $0x40] sm:$0xff]
    %v55 = vld [vmem:[#allocation5 + $0x48] sm:$0xff]
    %v56 = vld [vmem:[#allocation5 + $0x50] sm:$0xff]
    %v57 = vld [vmem:[#allocation5 + $0x58] sm:$0xff]
    %v58 = vld [vmem:[#allocation5 + $0x60] sm:$0xff]
    %v59 = vld [vmem:[#allocation5 + $0x68] sm:$0xff]
    %v60 = vld [vmem:[#allocation5 + $0x70] sm:$0xff]
    %v61 = vld [vmem:[#allocation5 + $0x78] sm:$0xff]
    %v62 = vld [vmem:[%s2] sm:$0x1]
    %v64 = vperm.slane %v62, 0
    %66 = vmatpush.msra.mxu0 %v61
    %67 = vmatpush.msra.mxu0 %v60
    %68 = vmatpush.msra.mxu0 %v59
    %69 = vmatpush.msra.mxu0 %v58
    %70 = vmatpush.msra.mxu0 %v57
    %71 = vmatpush.msra.mxu0 %v56
    %72 = vmatpush.msra.mxu0 %v55
    %73 = vmatpush.msra.mxu0 %v54
    %74 = vmatpush.msra.mxu0 %v53
    %75 = vmatpush.msra.mxu0 %v52
    %76 = vmatpush.msra.mxu0 %v51
    %77 = vmatpush.msra.mxu0 %v50
    %78 = vmatpush.msra.mxu0 %v49
    %79 = vmatpush.msra.mxu0 %v48
    %80 = vmatpush.msra.mxu0 %v47
    %81 = vmatpush.msra.mxu0 %v46
    %82 = vmatmul.f32.gmra.mxu0 %v45
    %v83 = vpop.f32.mrf.mxu0
    %v84 = vadd.f32 %v64, %v83
    %85 = vdwg.mxu0
    %v86 = vsub.f32 0.0, %v84
    %v87 = vmul.f32 %v86, 1.442695
    %v88 = vpow.pop %v87
    %v89 = vadd.f32 %v88, 1.0
    %v90 = vrcp.pop %v89
    %v91 = vmul.f32 %v89, %v90
    %v92 = vsub.f32 1.0, %v91
    %v93 = vmul.f32 %v90, %v92
    %v94 = vadd.f32 %v90, %v93
    %vm95 = vweird.f32 %v89
    %vm96 = vweird.f32 %v90
    %vm97 = vmor %vm95, %vm96
    %v98 = vsel %vm97, %v90, %v94
    %v99 = vand.u32 2147483647, %v89
    %vm100 = vcmp.eq.f32.partialorder %v99, 8.507059e+37
    %v101 = vand.u32 %v89, 2147483648
    %v102 = vor.u32 1.1754944e-38, %v101
    %v103 = vsel %vm100, %v102, %v98
    %v104 = vmul.f32 %v103, %v45
    %105 = vst [vmem:[#allocation7] sm:$0xff] %v104
    // Predicated region
    $region22: #{tpu_custom_call.1} parent=1 // pred_check
      _
    $region23: #{tpu_custom_call.1} parent=1 // pred_check_branch
      %107 = sbr.rel (0) target = $region25
    $region24: #{tpu_custom_call.1} parent=1 // pred_region
      %109 = vsyncadd [#allocation4], 0
      %s111 = sshll.u32 [#allocation7], 4
      %s112 = int_to_ptr.vmem [resolvable:$true] %s111
      %s113 = sshll.u32 %s3, 4
      %s114 = int_to_ptr.hbm [resolvable:$true] %s113
      %116 = dma.vmem_to_hbm [thread:$0]  %s112, 128, %s114, [#allocation4]
    $region25: #{tpu_custom_call.1} parent=1 // pred_fallthru
      _
    // Predicated region
    $region26: #{tpu_custom_call.1} parent=1 // pred_check
      _
    $region27: #{tpu_custom_call.1} parent=1 // pred_check_branch
      %118 = sbr.rel (0) target = $region29
    $region28: #{tpu_custom_call.1} parent=1 // pred_region
      %120 = dma.done [#allocation4], 128
    $region29: #{tpu_custom_call.1} parent=1 // pred_fallthru
      _
    %121 = vsyncpa [#allocation3], 1
    %122 = vsyncpa [#allocation6], 1
    %123 = vsyncpa [#allocation4], 1

// kernel: tpu_custom_call.1
$region0: #{tpu_custom_call.1}
  #allocation0 [shape = 'u32[]', space=smem, size = 0x4, offset = 0x4, fixed_abs, tag = 'smem constant byte address 0x4 - core index']
  #allocation1 [shape = 'u32[72,128]{1,0:T(1,128)}', space=vmem, size = 0x9000, scoped, tag = 'internal scratch']
  %s0 = inlined_call_operand.hbm [shape: f32[8,128], index: 0, kind: input, shape index: {}]
  %s1 = inlined_call_operand.hbm [shape: f32[128,128], index: 1, kind: input, shape index: {}]
  %s2 = inlined_call_operand.vmem [shape: f32[1,128], index: 2, kind: input, shape index: {}]
  %s3 = inlined_call_operand.hbm [shape: f32[8,128], index: 3, kind: output, shape index: {}]
  %s4 = sld [smem:[#allocation0]]
  $region30: #{tpu_custom_call.1} parent=0
    _
  %s6 = ssub.s32 1, %s4
  %s7 = scalar_select 0, %s6, %s4
  $region1: #{tpu_custom_call.1} parent=0
    #allocation2 [shape = 'u8[4096]{0}', space=vmem, size = 0x1000, scoped, tag = 'input window, operand 0, single buffered']
    #allocation3 [shape = 's32[1]{0}', space=sflag, size = 0x4, scoped, tag = 'scoped memory for tpu_custom_call.1']
    #allocation4 [shape = 's32[1]{0}', space=sflag, size = 0x4, scoped, tag = 'scoped memory for tpu_custom_call.1']
    #allocation5 [shape = 'u8[65536]{0}', space=vmem, size = 0x10000, scoped, tag = 'input window, operand 1, single buffered']
    #allocation6 [shape = 's32[1]{0}', space=sflag, size = 0x4, scoped, tag = 'scoped memory for tpu_custom_call.1']
    #allocation7 [shape = 'u8[4096]{0}', space=vmem, size = 0x1000, scoped, tag = 'output window, operand 0, single buffered']
    %8 = vsyncpa [#allocation3], 0
    %9 = vsyncpa [#allocation6], 0
    %10 = vsyncpa [#allocation4], 0
    // Predicated region
    $region2: #{tpu_custom_call.1} parent=1 // pred_check
      _
    $region3: #{tpu_custom_call.1} parent=1 // pred_check_branch
      %12 = sbr.rel (0) target = $region5
    $region4: #{tpu_custom_call.1} parent=1 // pred_region
      %14 = vsyncadd [#allocation3], 0
      %s16 = sshll.u32 %s0, 4
      %s17 = int_to_ptr.hbm [resolvable:$true] %s16
      %s18 = sshll.u32 [#allocation2], 4
      %s19 = int_to_ptr.vmem [resolvable:$true] %s18
      %21 = dma.hbm_to_vmem [thread:$0]  %s17, 128, %s19, [#allocation3]
    $region5: #{tpu_custom_call.1} parent=1 // pred_fallthru
      _
    // Predicated region
    $region6: #{tpu_custom_call.1} parent=1 // pred_check
      _
    $region7: #{tpu_custom_call.1} parent=1 // pred_check_branch
      %23 = sbr.rel (0) target = $region9
    $region8: #{tpu_custom_call.1} parent=1 // pred_region
      %25 = vsyncadd [#allocation6], 0
      %s26 = sshll.u32 %s1, 4
      %s27 = int_to_ptr.hbm [resolvable:$true] %s26
      %s28 = sshll.u32 [#allocation5], 4
      %s29 = int_to_ptr.vmem [resolvable:$true] %s28
      %34 = dma.hbm_to_vmem [thread:$0]  %s27, 2048, %s29, [#allocation6], 128, 128, 8
    $region9: #{tpu_custom_call.1} parent=1 // pred_fallthru
      _
    // Predicated region
    $region10: #{tpu_custom_call.1} parent=1 // pred_check
      _
    $region11: #{tpu_custom_call.1} parent=1 // pred_check_branch
      %36 = sbr.rel (0) target = $region13
    $region12: #{tpu_custom_call.1} parent=1 // pred_region
      _
    $region13: #{tpu_custom_call.1} parent=1 // pred_fallthru
      _
    // Predicated region
    $region14: #{tpu_custom_call.1} parent=1 // pred_check
      _
    $region15: #{tpu_custom_call.1} parent=1 // pred_check_branch
      %38 = sbr.rel (0) target = $region17
    $region16: #{tpu_custom_call.1} parent=1 // pred_region
      %40 = dma.done [#allocation3], 128
    $region17: #{tpu_custom_call.1} parent=1 // pred_fallthru
      _
    // Predicated region
    $region18: #{tpu_custom_call.1} parent=1 // pred_check
      _
    $region19: #{tpu_custom_call.1} parent=1 // pred_check_branch
      %42 = sbr.rel (0) target = $region21
    $region20: #{tpu_custom_call.1} parent=1 // pred_region
      %44 = dma.done [#allocation6], 2048
    $region21: #{tpu_custom_call.1} parent=1 // pred_fallthru
      _
    %v45 = vld [vmem:[#allocation2] sm:$0xff]
    %v46 = vld [vmem:[#allocation5] sm:$0xff]
    %v47 = vld [vmem:[#allocation5 + $0x8] sm:$0xff]
    %v48 = vld [vmem:[#allocation5 + $0x10] sm:$0xff]
    %v49 = vld [vmem:[#allocation5 + $0x18] sm:$0xff]
    %v50 = vld [vmem:[#allocation5 + $0x20] sm:$0xff]
    %v51 = vld [vmem:[#allocation5 + $0x28] sm:$0xff]
    %v52 = vld [vmem:[#allocation5 + $0x30] sm:$0xff]
    %v53 = vld [vmem:[#allocation5 + $0x38] sm:$0xff]
    %v54 = vld [vmem:[#allocation5 + $0x40] sm:$0xff]
    %v55 = vld [vmem:[#allocation5 + $0x48] sm:$0xff]
    %v56 = vld [vmem:[#allocation5 + $0x50] sm:$0xff]
    %v57 = vld [vmem:[#allocation5 + $0x58] sm:$0xff]
    %v58 = vld [vmem:[#allocation5 + $0x60] sm:$0xff]
    %v59 = vld [vmem:[#allocation5 + $0x68] sm:$0xff]
    %v60 = vld [vmem:[#allocation5 + $0x70] sm:$0xff]
    %v61 = vld [vmem:[#allocation5 + $0x78] sm:$0xff]
    %v62 = vld [vmem:[%s2] sm:$0x1]
    %v64 = vperm.slane %v62, 0
    %66 = vmatpush.msra.mxu0 %v61
    %67 = vmatpush.msra.mxu0 %v60
    %68 = vmatpush.msra.mxu0 %v59
    %69 = vmatpush.msra.mxu0 %v58
    %70 = vmatpush.msra.mxu0 %v57
    %71 = vmatpush.msra.mxu0 %v56
    %72 = vmatpush.msra.mxu0 %v55
    %73 = vmatpush.msra.mxu0 %v54
    %74 = vmatpush.msra.mxu0 %v53
    %75 = vmatpush.msra.mxu0 %v52
    %76 = vmatpush.msra.mxu0 %v51
    %77 = vmatpush.msra.mxu0 %v50
    %78 = vmatpush.msra.mxu0 %v49
    %79 = vmatpush.msra.mxu0 %v48
    %80 = vmatpush.msra.mxu0 %v47
    %81 = vmatpush.msra.mxu0 %v46
    %82 = vmatmul.f32.gmra.mxu0 %v45
    %v83 = vpop.f32.mrf.mxu0
    %v84 = vadd.f32 %v64, %v83
    %85 = vdwg.mxu0
    %v86 = vsub.f32 0.0, %v84
    %v87 = vmul.f32 %v86, 1.442695
    %v88 = vpow.pop %v87
    %v89 = vadd.f32 %v88, 1.0
    %v90 = vrcp.pop %v89
    %v91 = vmul.f32 %v89, %v90
    %v92 = vsub.f32 1.0, %v91
    %v93 = vmul.f32 %v90, %v92
    %v94 = vadd.f32 %v90, %v93
    %vm95 = vweird.f32 %v89
    %vm96 = vweird.f32 %v90
    %vm97 = vmor %vm95, %vm96
    %v98 = vsel %vm97, %v90, %v94
    %v99 = vand.u32 2147483647, %v89
    %vm100 = vcmp.eq.f32.partialorder %v99, 8.507059e+37
    %v101 = vand.u32 %v89, 2147483648
    %v102 = vor.u32 1.1754944e-38, %v101
    %v103 = vsel %vm100, %v102, %v98
    %v104 = vmul.f32 %v103, %v45
    %105 = vst [vmem:[#allocation7] sm:$0xff] %v104
    // Predicated region
    $region22: #{tpu_custom_call.1} parent=1 // pred_check
      _
    $region23: #{tpu_custom_call.1} parent=1 // pred_check_branch
      %107 = sbr.rel (0) target = $region25
    $region24: #{tpu_custom_call.1} parent=1 // pred_region
      %109 = vsyncadd [#allocation4], 0
      %s111 = sshll.u32 [#allocation7], 4
      %s112 = int_to_ptr.vmem [resolvable:$true] %s111
      %s113 = sshll.u32 %s3, 4
      %s114 = int_to_ptr.hbm [resolvable:$true] %s113
      %116 = dma.vmem_to_hbm [thread:$0]  %s112, 128, %s114, [#allocation4]
    $region25: #{tpu_custom_call.1} parent=1 // pred_fallthru
      _
    // Predicated region
    $region26: #{tpu_custom_call.1} parent=1 // pred_check
      _
    $region27: #{tpu_custom_call.1} parent=1 // pred_check_branch
      %118 = sbr.rel (0) target = $region29
    $region28: #{tpu_custom_call.1} parent=1 // pred_region
      %120 = dma.done [#allocation4], 128
    $region29: #{tpu_custom_call.1} parent=1 // pred_fallthru
      _
    %121 = vsyncpa [#allocation3], 1
    %122 = vsyncpa [#allocation6], 1
    %123 = vsyncpa [#allocation4], 1

</llo_original>
